<compile_context>
chip_gen: v6e
topology: v6e:2x2x1
jax: 0.10.0
libtpu: 0.0.40
codegen_flags: <defaults>
</compile_context>

<pallas_src>
import functools

import jax
import jax.numpy as jnp
import numpy as np
from jax import lax
from jax.experimental import pallas as pl
from jax.experimental.pallas import tpu as pltpu

_LANES = 128
_SUBLANES = 8


def _depth_loss_kernel(eps,
                       pred_ref, target_ref, out_ref,
                       acc_sq, acc_d, acc_d2, acc_gx, acc_gy):
    i = pl.program_id(1)

    @pl.when(i == 0)
    def _init():
        acc_sq[...] = jnp.zeros_like(acc_sq)
        acc_d[...] = jnp.zeros_like(acc_d)
        acc_d2[...] = jnp.zeros_like(acc_d2)
        acc_gx[...] = jnp.zeros_like(acc_gx)
        acc_gy[...] = jnp.zeros_like(acc_gy)

    p = pred_ref[...].astype(jnp.float32)    # (TN, H, W)
    t = target_ref[...].astype(jnp.float32)  # (TN, H, W)

    # --- MSE partial sums (per-position; reduce only over the TN axis) ---
    diff = p - t
    acc_sq[...] += jnp.sum(diff * diff, axis=0)

    # --- SILog partial sums: single log per element ---
    d = jnp.log((p + eps) / (t + eps))
    acc_d[...] += jnp.sum(d, axis=0)
    acc_d2[...] += jnp.sum(d * d, axis=0)

    # --- Gradient partial sums, derived from diff (pdx - tdx == diff_dx) ---
    acc_gx[...] += jnp.sum(jnp.abs(diff[:, :, :-1] - diff[:, :, 1:]), axis=0)
    acc_gy[...] += jnp.sum(jnp.abs(diff[:, :-1, :] - diff[:, 1:, :]), axis=0)

    @pl.when(i == pl.num_programs(1) - 1)
    def _finalize():
        # One full XLU reduction per accumulator, once per core.  Raw sums are
        # packed into sublane 0 / lanes 0..4 of an (8, 128) block; zeros
        # elsewhere so the host-side combine is a plain sum.
        sub = lax.broadcasted_iota(jnp.int32, (1, _SUBLANES, _LANES), 1)
        lane = lax.broadcasted_iota(jnp.int32, (1, _SUBLANES, _LANES), 2)
        blk = jnp.zeros((1, _SUBLANES, _LANES), jnp.float32)
        for idx, acc in enumerate((acc_sq, acc_d, acc_d2, acc_gx, acc_gy)):
            s = jnp.sum(acc[...], keepdims=True)          # (1, 1)
            blk = jnp.where((sub == 0) & (lane == idx), s, blk)
        out_ref[...] = blk


def depth_loss(pred, target, *, alpha=1.0, beta=0.1, delta=0.1,
               variance_focus=0.85, eps=1e-8):
    """pred, target: (B, C, H, W) arrays (C typically 1). Depths must be > 0."""
    B, C, H, W = pred.shape
    N = B * C
    p = pred.reshape(N, H, W)
    t = target.reshape(N, H, W)

    # Block sizing: ~1 MiB of f32 working set per input per grid step.
    # TODO(synk): for very large single images (H*W*4B >> 4 MiB) additionally
    # tile H with a 1-row halo for the dy term.
    tn = max(1, min(N, (1 << 20) // (H * W * 4)))
    nb_total = -(-N // tn)
    cores = 2 if nb_total >= 2 else 1          # v7x: shard images across both TCs
    nb_per_core = -(-nb_total // cores)
    n_padded = cores * nb_per_core * tn
    if n_padded != N:
        # Pad with ones: diff == 0, log-ratio == 0, gradients == 0, so padded
        # images contribute exactly nothing to any partial sum.
        pad = jnp.ones((n_padded - N, H, W), p.dtype)
        p = jnp.concatenate([p, pad], axis=0)
        t = jnp.concatenate([t, pad], axis=0)

    kernel = functools.partial(_depth_loss_kernel, eps)
    in_map = lambda c, i: (c * nb_per_core + i, 0, 0)

    partials = pl.pallas_call(
        kernel,
        out_shape=jax.ShapeDtypeStruct((cores, _SUBLANES, _LANES), jnp.float32),
        grid_spec=pltpu.PrefetchScalarGridSpec(
            num_scalar_prefetch=0,
            grid=(cores, nb_per_core),
            in_specs=[
                pl.BlockSpec((tn, H, W), in_map),
                pl.BlockSpec((tn, H, W), in_map),
            ],
            out_specs=pl.BlockSpec((1, _SUBLANES, _LANES),
                                   lambda c, i: (c, 0, 0)),
            scratch_shapes=[
                pltpu.VMEM((H, W), jnp.float32),      # sum diff^2
                pltpu.VMEM((H, W), jnp.float32),      # sum d
                pltpu.VMEM((H, W), jnp.float32),      # sum d^2
                pltpu.VMEM((H, W - 1), jnp.float32),  # sum |d(diff)/dx|
                pltpu.VMEM((H - 1, W), jnp.float32),  # sum |d(diff)/dy|
            ],
        ),
        compiler_params=pltpu.CompilerParams(
            dimension_semantics=("parallel", "arbitrary"),
            vmem_limit_bytes=32 * 1024 * 1024,
        ),
    )(p, t)

    # Combine per-core raw sums; tiny scalar math in plain JAX.
    sums = jnp.sum(partials, axis=(0, 1))     # (128,) — zeros beyond lane 4
    s_sq, s_d, s_d2 = sums[0], sums[1], sums[2]
    s_gx, s_gy = sums[3], sums[4]

    n = N * H * W
    n_dx = N * H * (W - 1)
    n_dy = N * (H - 1) * W
    inv_n, inv_dx, inv_dy = 1.0 / n, 1.0 / n_dx, 1.0 / n_dy  # f64-derived reciprocals

    mse = s_sq * inv_n
    mean_d2 = s_d2 * inv_n
    # torch.var default is unbiased (correction=1); one-pass formula.
    var = (s_d2 - s_d * s_d * inv_n) * (1.0 / (n - 1))
    silog = variance_focus * var + (1.0 - variance_focus) * mean_d2
    grad = s_gx * inv_dx + s_gy * inv_dy
    return alpha * mse + beta * silog + delta * grad


def depth_loss_ref(pred, target, *, alpha=1.0, beta=0.1, delta=0.1,
                   variance_focus=0.85, eps=1e-8):
    pred = pred.astype(jnp.float32)
    target = target.astype(jnp.float32)
    loss_mse = jnp.mean((pred - target) ** 2)
    d = jnp.log(pred + eps) - jnp.log(target + eps)
    loss_silog = variance_focus * jnp.var(d, ddof=1) + \
        (1.0 - variance_focus) * jnp.mean(d ** 2)
    dx = lambda x: x[:, :, :, :-1] - x[:, :, :, 1:]
    dy = lambda x: x[:, :, :-1, :] - x[:, :, 1:, :]
    loss_grad = jnp.mean(jnp.abs(dx(pred) - dx(target))) + \
        jnp.mean(jnp.abs(dy(pred) - dy(target)))
    return alpha * loss_mse + beta * loss_silog + delta * loss_grad


if __name__ == "__main__":
    # DepthLoss has no learnable parameters, so nothing to initialize.
    key = jax.random.PRNGKey(0)
    k1, k2 = jax.random.split(key)
    B, C, H, W = 2, 1, 16, 16
    # Depth maps must be positive (they go through log).
    pred = jax.random.uniform(k1, (B, C, H, W), jnp.float32, 0.5, 10.0)
    target = jax.random.uniform(k2, (B, C, H, W), jnp.float32, 0.5, 10.0)

    loss = depth_loss(pred, target)
    jax.block_until_ready(loss)

    ref = depth_loss_ref(pred, target)
    assert np.allclose(np.asarray(loss), np.asarray(ref), rtol=1e-4, atol=1e-5), \
        (float(loss), float(ref))
    print("KERNEL_OK")
</pallas_src>

<mosaic_0001>
module attributes {stable_mosaic.version = 11 : i64} {
  func.func @_depth_loss_kernel(%arg0: i32, %arg1: i32, %arg2: memref<2x16x16xf32, #tpu.memory_space<vmem>>, %arg3: memref<2x16x16xf32, #tpu.memory_space<vmem>>, %arg4: memref<1x8x128xf32, #tpu.memory_space<vmem>>, %arg5: memref<16x16xf32, #tpu.memory_space<vmem>>, %arg6: memref<16x16xf32, #tpu.memory_space<vmem>>, %arg7: memref<16x16xf32, #tpu.memory_space<vmem>>, %arg8: memref<16x15xf32, #tpu.memory_space<vmem>>, %arg9: memref<15x16xf32, #tpu.memory_space<vmem>>) attributes {dimension_semantics = [#tpu.dimension_semantics<parallel>, #tpu.dimension_semantics<arbitrary>], iteration_bounds = array<i64: 1, 1>, scalar_prefetch = 0 : i64, scratch_operands = 5 : i64, tpu.core_type = #tpu.core_type<tc>, window_params = [{transform_indices = @transform_0, window_bounds = array<i64: 2, 16, 16>}, {transform_indices = @transform_1, window_bounds = array<i64: 2, 16, 16>}, {transform_indices = @transform_2, window_bounds = array<i64: 1, 8, 128>}]} {
    %c0_i32 = arith.constant 0 : i32
    %0 = arith.cmpi eq, %arg1, %c0_i32 : i32
    %1 = arith.extui %0 : i1 to i32
    %c0_i32_0 = arith.constant 0 : i32
    %2 = arith.cmpi ne, %1, %c0_i32_0 : i32
    scf.if %2 {
      %cst_34 = arith.constant 0.000000e+00 : f32
      %45 = vector.broadcast %cst_34 : f32 to vector<16x16xf32>
      %c0_35 = arith.constant 0 : index
      %c0_36 = arith.constant 0 : index
      %46 = vector.load %arg5[%c0_35, %c0_36] : memref<16x16xf32, #tpu.memory_space<vmem>>, vector<16x16xf32>
      tpu.vector_store %arg5[%c0_35, %c0_36], %45 {strides = array<i32>} : memref<16x16xf32, #tpu.memory_space<vmem>>, vector<16x16xf32>,
      %cst_37 = arith.constant 0.000000e+00 : f32
      %47 = vector.broadcast %cst_37 : f32 to vector<16x16xf32>
      %c0_38 = arith.constant 0 : index
      %c0_39 = arith.constant 0 : index
      %48 = vector.load %arg6[%c0_38, %c0_39] : memref<16x16xf32, #tpu.memory_space<vmem>>, vector<16x16xf32>
      tpu.vector_store %arg6[%c0_38, %c0_39], %47 {strides = array<i32>} : memref<16x16xf32, #tpu.memory_space<vmem>>, vector<16x16xf32>,
      %cst_40 = arith.constant 0.000000e+00 : f32
      %49 = vector.broadcast %cst_40 : f32 to vector<16x16xf32>
      %c0_41 = arith.constant 0 : index
      %c0_42 = arith.constant 0 : index
      %50 = vector.load %arg7[%c0_41, %c0_42] : memref<16x16xf32, #tpu.memory_space<vmem>>, vector<16x16xf32>
      tpu.vector_store %arg7[%c0_41, %c0_42], %49 {strides = array<i32>} : memref<16x16xf32, #tpu.memory_space<vmem>>, vector<16x16xf32>,
      %cst_43 = arith.constant 0.000000e+00 : f32
      %51 = vector.broadcast %cst_43 : f32 to vector<16x15xf32>
      %c0_44 = arith.constant 0 : index
      %c0_45 = arith.constant 0 : index
      %52 = vector.load %arg8[%c0_44, %c0_45] : memref<16x15xf32, #tpu.memory_space<vmem>>, vector<16x15xf32>
      tpu.vector_store %arg8[%c0_44, %c0_45], %51 {strides = array<i32>} : memref<16x15xf32, #tpu.memory_space<vmem>>, vector<16x15xf32>,
      %cst_46 = arith.constant 0.000000e+00 : f32
      %53 = vector.broadcast %cst_46 : f32 to vector<15x16xf32>
      %c0_47 = arith.constant 0 : index
      %c0_48 = arith.constant 0 : index
      %54 = vector.load %arg9[%c0_47, %c0_48] : memref<15x16xf32, #tpu.memory_space<vmem>>, vector<15x16xf32>
      tpu.vector_store %arg9[%c0_47, %c0_48], %53 {strides = array<i32>} : memref<15x16xf32, #tpu.memory_space<vmem>>, vector<15x16xf32>,
    } else {
    }
    %c0 = arith.constant 0 : index
    %c0_1 = arith.constant 0 : index
    %c0_2 = arith.constant 0 : index
    %3 = vector.load %arg2[%c0, %c0_1, %c0_2] : memref<2x16x16xf32, #tpu.memory_space<vmem>>, vector<2x16x16xf32>
    %c0_3 = arith.constant 0 : index
    %c0_4 = arith.constant 0 : index
    %c0_5 = arith.constant 0 : index
    %4 = vector.load %arg3[%c0_3, %c0_4, %c0_5] : memref<2x16x16xf32, #tpu.memory_space<vmem>>, vector<2x16x16xf32>
    %5 = arith.subf %3, %4 : vector<2x16x16xf32>
    %c0_6 = arith.constant 0 : index
    %c0_7 = arith.constant 0 : index
    %6 = vector.load %arg5[%c0_6, %c0_7] : memref<16x16xf32, #tpu.memory_space<vmem>>, vector<16x16xf32>
    %7 = arith.mulf %5, %5 : vector<2x16x16xf32>
    %cst = arith.constant dense<0.000000e+00> : vector<16x16xf32>
    %8 = vector.multi_reduction <add>, %7, %cst [0] : vector<2x16x16xf32> to vector<16x16xf32>
    %9 = arith.addf %6, %8 : vector<16x16xf32>
    %c0_8 = arith.constant 0 : index
    %c0_9 = arith.constant 0 : index
    %10 = vector.load %arg5[%c0_8, %c0_9] : memref<16x16xf32, #tpu.memory_space<vmem>>, vector<16x16xf32>
    tpu.vector_store %arg5[%c0_8, %c0_9], %9 {strides = array<i32>} : memref<16x16xf32, #tpu.memory_space<vmem>>, vector<16x16xf32>,
    %cst_10 = arith.constant 9.99999993E-9 : f32
    %11 = vector.broadcast %cst_10 : f32 to vector<2x16x16xf32>
    %12 = arith.addf %3, %11 : vector<2x16x16xf32>
    %cst_11 = arith.constant 9.99999993E-9 : f32
    %13 = vector.broadcast %cst_11 : f32 to vector<2x16x16xf32>
    %14 = arith.addf %4, %13 : vector<2x16x16xf32>
    %15 = arith.divf %12, %14 : vector<2x16x16xf32>
    %16 = math.log %15 : vector<2x16x16xf32>
    %c0_12 = arith.constant 0 : index
    %c0_13 = arith.constant 0 : index
    %17 = vector.load %arg6[%c0_12, %c0_13] : memref<16x16xf32, #tpu.memory_space<vmem>>, vector<16x16xf32>
    %cst_14 = arith.constant dense<0.000000e+00> : vector<16x16xf32>
    %18 = vector.multi_reduction <add>, %16, %cst_14 [0] : vector<2x16x16xf32> to vector<16x16xf32>
    %19 = arith.addf %17, %18 : vector<16x16xf32>
    %c0_15 = arith.constant 0 : index
    %c0_16 = arith.constant 0 : index
    %20 = vector.load %arg6[%c0_15, %c0_16] : memref<16x16xf32, #tpu.memory_space<vmem>>, vector<16x16xf32>
    tpu.vector_store %arg6[%c0_15, %c0_16], %19 {strides = array<i32>} : memref<16x16xf32, #tpu.memory_space<vmem>>, vector<16x16xf32>,
    %c0_17 = arith.constant 0 : index
    %c0_18 = arith.constant 0 : index
    %21 = vector.load %arg7[%c0_17, %c0_18] : memref<16x16xf32, #tpu.memory_space<vmem>>, vector<16x16xf32>
    %22 = arith.mulf %16, %16 : vector<2x16x16xf32>
    %cst_19 = arith.constant dense<0.000000e+00> : vector<16x16xf32>
    %23 = vector.multi_reduction <add>, %22, %cst_19 [0] : vector<2x16x16xf32> to vector<16x16xf32>
    %24 = arith.addf %21, %23 : vector<16x16xf32>
    %c0_20 = arith.constant 0 : index
    %c0_21 = arith.constant 0 : index
    %25 = vector.load %arg7[%c0_20, %c0_21] : memref<16x16xf32, #tpu.memory_space<vmem>>, vector<16x16xf32>
    tpu.vector_store %arg7[%c0_20, %c0_21], %24 {strides = array<i32>} : memref<16x16xf32, #tpu.memory_space<vmem>>, vector<16x16xf32>,
    %c0_22 = arith.constant 0 : index
    %c0_23 = arith.constant 0 : index
    %26 = vector.load %arg8[%c0_22, %c0_23] : memref<16x15xf32, #tpu.memory_space<vmem>>, vector<16x15xf32>
    %27 = vector.extract_strided_slice %5 {offsets = [0, 0, 0], sizes = [2, 16, 15], strides = [1, 1, 1]} : vector<2x16x16xf32> to vector<2x16x15xf32>
    %28 = vector.extract_strided_slice %5 {offsets = [0, 0, 1], sizes = [2, 16, 15], strides = [1, 1, 1]} : vector<2x16x16xf32> to vector<2x16x15xf32>
    %29 = arith.subf %27, %28 : vector<2x16x15xf32>
    %30 = math.absf %29 : vector<2x16x15xf32>
    %cst_24 = arith.constant dense<0.000000e+00> : vector<16x15xf32>
    %31 = vector.multi_reduction <add>, %30, %cst_24 [0] : vector<2x16x15xf32> to vector<16x15xf32>
    %32 = arith.addf %26, %31 : vector<16x15xf32>
    %c0_25 = arith.constant 0 : index
    %c0_26 = arith.constant 0 : index
    %33 = vector.load %arg8[%c0_25, %c0_26] : memref<16x15xf32, #tpu.memory_space<vmem>>, vector<16x15xf32>
    tpu.vector_store %arg8[%c0_25, %c0_26], %32 {strides = array<i32>} : memref<16x15xf32, #tpu.memory_space<vmem>>, vector<16x15xf32>,
    %c0_27 = arith.constant 0 : index
    %c0_28 = arith.constant 0 : index
    %34 = vector.load %arg9[%c0_27, %c0_28] : memref<15x16xf32, #tpu.memory_space<vmem>>, vector<15x16xf32>
    %35 = vector.extract_strided_slice %5 {offsets = [0, 0, 0], sizes = [2, 15, 16], strides = [1, 1, 1]} : vector<2x16x16xf32> to vector<2x15x16xf32>
    %36 = vector.extract_strided_slice %5 {offsets = [0, 1, 0], sizes = [2, 15, 16], strides = [1, 1, 1]} : vector<2x16x16xf32> to vector<2x15x16xf32>
    %37 = arith.subf %35, %36 : vector<2x15x16xf32>
    %38 = math.absf %37 : vector<2x15x16xf32>
    %cst_29 = arith.constant dense<0.000000e+00> : vector<15x16xf32>
    %39 = vector.multi_reduction <add>, %38, %cst_29 [0] : vector<2x15x16xf32> to vector<15x16xf32>
    %40 = arith.addf %34, %39 : vector<15x16xf32>
    %c0_30 = arith.constant 0 : index
    %c0_31 = arith.constant 0 : index
    %41 = vector.load %arg9[%c0_30, %c0_31] : memref<15x16xf32, #tpu.memory_space<vmem>>, vector<15x16xf32>
    tpu.vector_store %arg9[%c0_30, %c0_31], %40 {strides = array<i32>} : memref<15x16xf32, #tpu.memory_space<vmem>>, vector<15x16xf32>,
    %c0_i32_32 = arith.constant 0 : i32
    %42 = arith.cmpi eq, %arg1, %c0_i32_32 : i32
    %43 = arith.extui %42 : i1 to i32
    %c0_i32_33 = arith.constant 0 : i32
    %44 = arith.cmpi ne, %43, %c0_i32_33 : i32
    scf.if %44 {
      %45 = tpu.iota {dimensions = array<i32: 1>} : vector<1x8x128xi32>
      %46 = tpu.iota {dimensions = array<i32: 2>} : vector<1x8x128xi32>
      %cst_34 = arith.constant 0.000000e+00 : f32
      %47 = vector.broadcast %cst_34 : f32 to vector<1x8x128xf32>
      %c0_35 = arith.constant 0 : index
      %c0_36 = arith.constant 0 : index
      %48 = vector.load %arg5[%c0_35, %c0_36] : memref<16x16xf32, #tpu.memory_space<vmem>>, vector<16x16xf32>
      %49 = vector.shape_cast %48 : vector<16x16xf32> to vector<1x16x16xf32>
      %cst_37 = arith.constant dense<0.000000e+00> : vector<1xf32>
      %50 = vector.multi_reduction <add>, %49, %cst_37 [1, 2] : vector<1x16x16xf32> to vector<1xf32>
      %51 = vector.shape_cast %50 : vector<1xf32> to vector<1x1x1xf32>
      %52 = vector.extract %51[0, 0, 0] : f32 from vector<1x1x1xf32>
      %53 = vector.broadcast %52 : f32 to vector<1x1xf32>
      %c0_i32_38 = arith.constant 0 : i32
      %54 = vector.broadcast %c0_i32_38 : i32 to vector<1x8x128xi32>
      %55 = arith.cmpi eq, %45, %54 : vector<1x8x128xi32>
      %c0_i32_39 = arith.constant 0 : i32
      %56 = vector.broadcast %c0_i32_39 : i32 to vector<1x8x128xi32>
      %57 = arith.cmpi eq, %46, %56 : vector<1x8x128xi32>
      %58 = arith.andi %55, %57 : vector<1x8x128xi1>
      %59 = vector.shape_cast %53 : vector<1x1xf32> to vector<1x1x1xf32>
      %60 = vector.broadcast %59 : vector<1x1x1xf32> to vector<1x8x128xf32>
      %61 = arith.select %58, %60, %47 : vector<1x8x128xi1>, vector<1x8x128xf32>
      %c0_40 = arith.constant 0 : index
      %c0_41 = arith.constant 0 : index
      %62 = vector.load %arg6[%c0_40, %c0_41] : memref<16x16xf32, #tpu.memory_space<vmem>>, vector<16x16xf32>
      %63 = vector.shape_cast %62 : vector<16x16xf32> to vector<1x16x16xf32>
      %cst_42 = arith.constant dense<0.000000e+00> : vector<1xf32>
      %64 = vector.multi_reduction <add>, %63, %cst_42 [1, 2] : vector<1x16x16xf32> to vector<1xf32>
      %65 = vector.shape_cast %64 : vector<1xf32> to vector<1x1x1xf32>
      %66 = vector.extract %65[0, 0, 0] : f32 from vector<1x1x1xf32>
      %67 = vector.broadcast %66 : f32 to vector<1x1xf32>
      %c0_i32_43 = arith.constant 0 : i32
      %68 = vector.broadcast %c0_i32_43 : i32 to vector<1x8x128xi32>
      %69 = arith.cmpi eq, %45, %68 : vector<1x8x128xi32>
      %c1_i32 = arith.constant 1 : i32
      %70 = vector.broadcast %c1_i32 : i32 to vector<1x8x128xi32>
      %71 = arith.cmpi eq, %46, %70 : vector<1x8x128xi32>
      %72 = arith.andi %69, %71 : vector<1x8x128xi1>
      %73 = vector.shape_cast %67 : vector<1x1xf32> to vector<1x1x1xf32>
      %74 = vector.broadcast %73 : vector<1x1x1xf32> to vector<1x8x128xf32>
      %75 = arith.select %72, %74, %61 : vector<1x8x128xi1>, vector<1x8x128xf32>
      %c0_44 = arith.constant 0 : index
      %c0_45 = arith.constant 0 : index
      %76 = vector.load %arg7[%c0_44, %c0_45] : memref<16x16xf32, #tpu.memory_space<vmem>>, vector<16x16xf32>
      %77 = vector.shape_cast %76 : vector<16x16xf32> to vector<1x16x16xf32>
      %cst_46 = arith.constant dense<0.000000e+00> : vector<1xf32>
      %78 = vector.multi_reduction <add>, %77, %cst_46 [1, 2] : vector<1x16x16xf32> to vector<1xf32>
      %79 = vector.shape_cast %78 : vector<1xf32> to vector<1x1x1xf32>
      %80 = vector.extract %79[0, 0, 0] : f32 from vector<1x1x1xf32>
      %81 = vector.broadcast %80 : f32 to vector<1x1xf32>
      %c0_i32_47 = arith.constant 0 : i32
      %82 = vector.broadcast %c0_i32_47 : i32 to vector<1x8x128xi32>
      %83 = arith.cmpi eq, %45, %82 : vector<1x8x128xi32>
      %c2_i32 = arith.constant 2 : i32
      %84 = vector.broadcast %c2_i32 : i32 to vector<1x8x128xi32>
      %85 = arith.cmpi eq, %46, %84 : vector<1x8x128xi32>
      %86 = arith.andi %83, %85 : vector<1x8x128xi1>
      %87 = vector.shape_cast %81 : vector<1x1xf32> to vector<1x1x1xf32>
      %88 = vector.broadcast %87 : vector<1x1x1xf32> to vector<1x8x128xf32>
      %89 = arith.select %86, %88, %75 : vector<1x8x128xi1>, vector<1x8x128xf32>
      %c0_48 = arith.constant 0 : index
      %c0_49 = arith.constant 0 : index
      %90 = vector.load %arg8[%c0_48, %c0_49] : memref<16x15xf32, #tpu.memory_space<vmem>>, vector<16x15xf32>
      %91 = vector.shape_cast %90 : vector<16x15xf32> to vector<1x16x15xf32>
      %cst_50 = arith.constant dense<0.000000e+00> : vector<1xf32>
      %92 = vector.multi_reduction <add>, %91, %cst_50 [1, 2] : vector<1x16x15xf32> to vector<1xf32>
      %93 = vector.shape_cast %92 : vector<1xf32> to vector<1x1x1xf32>
      %94 = vector.extract %93[0, 0, 0] : f32 from vector<1x1x1xf32>
      %95 = vector.broadcast %94 : f32 to vector<1x1xf32>
      %c0_i32_51 = arith.constant 0 : i32
      %96 = vector.broadcast %c0_i32_51 : i32 to vector<1x8x128xi32>
      %97 = arith.cmpi eq, %45, %96 : vector<1x8x128xi32>
      %c3_i32 = arith.constant 3 : i32
      %98 = vector.broadcast %c3_i32 : i32 to vector<1x8x128xi32>
      %99 = arith.cmpi eq, %46, %98 : vector<1x8x128xi32>
      %100 = arith.andi %97, %99 : vector<1x8x128xi1>
      %101 = vector.shape_cast %95 : vector<1x1xf32> to vector<1x1x1xf32>
      %102 = vector.broadcast %101 : vector<1x1x1xf32> to vector<1x8x128xf32>
      %103 = arith.select %100, %102, %89 : vector<1x8x128xi1>, vector<1x8x128xf32>
      %c0_52 = arith.constant 0 : index
      %c0_53 = arith.constant 0 : index
      %104 = vector.load %arg9[%c0_52, %c0_53] : memref<15x16xf32, #tpu.memory_space<vmem>>, vector<15x16xf32>
      %105 = vector.shape_cast %104 : vector<15x16xf32> to vector<1x15x16xf32>
      %cst_54 = arith.constant dense<0.000000e+00> : vector<1xf32>
      %106 = vector.multi_reduction <add>, %105, %cst_54 [1, 2] : vector<1x15x16xf32> to vector<1xf32>
      %107 = vector.shape_cast %106 : vector<1xf32> to vector<1x1x1xf32>
      %108 = vector.extract %107[0, 0, 0] : f32 from vector<1x1x1xf32>
      %109 = vector.broadcast %108 : f32 to vector<1x1xf32>
      %c0_i32_55 = arith.constant 0 : i32
      %110 = vector.broadcast %c0_i32_55 : i32 to vector<1x8x128xi32>
      %111 = arith.cmpi eq, %45, %110 : vector<1x8x128xi32>
      %c4_i32 = arith.constant 4 : i32
      %112 = vector.broadcast %c4_i32 : i32 to vector<1x8x128xi32>
      %113 = arith.cmpi eq, %46, %112 : vector<1x8x128xi32>
      %114 = arith.andi %111, %113 : vector<1x8x128xi1>
      %115 = vector.shape_cast %109 : vector<1x1xf32> to vector<1x1x1xf32>
      %116 = vector.broadcast %115 : vector<1x1x1xf32> to vector<1x8x128xf32>
      %117 = arith.select %114, %116, %103 : vector<1x8x128xi1>, vector<1x8x128xf32>
      %c0_56 = arith.constant 0 : index
      %c0_57 = arith.constant 0 : index
      %c0_58 = arith.constant 0 : index
      %118 = vector.load %arg4[%c0_56, %c0_57, %c0_58] : memref<1x8x128xf32, #tpu.memory_space<vmem>>, vector<1x8x128xf32>
      tpu.vector_store %arg4[%c0_56, %c0_57, %c0_58], %117 {strides = array<i32>} : memref<1x8x128xf32, #tpu.memory_space<vmem>>, vector<1x8x128xf32>,
    } else {
    }
    return
  }
  func.func @transform_0(%arg0: i32, %arg1: i32) -> (i32, i32, i32) {
    %c1_i32 = arith.constant 1 : i32
    %0 = arith.muli %arg0, %c1_i32 : i32
    %1 = arith.addi %0, %arg1 : i32
    %c0_i32 = arith.constant 0 : i32
    %c0_i32_0 = arith.constant 0 : i32
    %c0_i32_1 = arith.constant 0 : i32
    return %1, %c0_i32, %c0_i32_0 : i32, i32, i32
  }
  func.func @transform_1(%arg0: i32, %arg1: i32) -> (i32, i32, i32) {
    %c1_i32 = arith.constant 1 : i32
    %0 = arith.muli %arg0, %c1_i32 : i32
    %1 = arith.addi %0, %arg1 : i32
    %c0_i32 = arith.constant 0 : i32
    %c0_i32_0 = arith.constant 0 : i32
    %c0_i32_1 = arith.constant 0 : i32
    return %1, %c0_i32, %c0_i32_0 : i32, i32, i32
  }
  func.func @transform_2(%arg0: i32, %arg1: i32) -> (i32, i32, i32) {
    %c0_i32 = arith.constant 0 : i32
    %c0_i32_0 = arith.constant 0 : i32
    %c0_i32_1 = arith.constant 0 : i32
    return %arg0, %c0_i32, %c0_i32_0 : i32, i32, i32
  }
}

</mosaic_0001>

<llo_original>
// kernel: tpu_custom_call.1
$region0: #{tpu_custom_call.1}
  #allocation0 [shape = 'u32[]', space=smem, size = 0x4, offset = 0x4, fixed_abs, tag = 'smem constant byte address 0x4 - core index']
  #allocation1 [shape = 'u32[144,128]{1,0:T(1,128)}', space=vmem, size = 0x12000, scoped, tag = 'internal scratch']
  #allocation2 [shape = 'f32[16,16]{1,0:T(8,128)}', space=vmem, size = 0x2000, scoped, tag = 'scratch operand']
  #allocation3 [shape = 'f32[16,16]{1,0:T(8,128)}', space=vmem, size = 0x2000, scoped, tag = 'scratch operand']
  #allocation4 [shape = 'f32[16,16]{1,0:T(8,128)}', space=vmem, size = 0x2000, scoped, tag = 'scratch operand']
  #allocation5 [shape = 'f32[16,15]{1,0:T(8,128)}', space=vmem, size = 0x2000, scoped, tag = 'scratch operand']
  #allocation6 [shape = 'f32[15,16]{1,0:T(8,128)}', space=vmem, size = 0x2000, scoped, tag = 'scratch operand']
  %s0 = inlined_call_operand.hbm [shape: f32[2,16,16], index: 0, kind: input, shape index: {}]
  %s1 = inlined_call_operand.hbm [shape: f32[2,16,16], index: 1, kind: input, shape index: {}]
  %s2 = inlined_call_operand.hbm [shape: f32[1,8,128], index: 2, kind: output, shape index: {}]
  %s3 = sld [smem:[#allocation0]]
  $region34: #{tpu_custom_call.1} parent=0
    _
  %s5 = ssub.s32 1, %s3
  %s6 = scalar_select 0, %s5, %s3
  $region1: #{tpu_custom_call.1} parent=0
    #allocation7 [shape = 'u8[16384]{0}', space=vmem, size = 0x4000, scoped, tag = 'input window, operand 0, single buffered']
    #allocation8 [shape = 's32[1]{0}', space=sflag, size = 0x4, scoped, tag = 'scoped memory for tpu_custom_call.1']
    #allocation9 [shape = 's32[1]{0}', space=sflag, size = 0x4, scoped, tag = 'scoped memory for tpu_custom_call.1']
    #allocation10 [shape = 'u8[16384]{0}', space=vmem, size = 0x4000, scoped, tag = 'input window, operand 1, single buffered']
    #allocation11 [shape = 's32[1]{0}', space=sflag, size = 0x4, scoped, tag = 'scoped memory for tpu_custom_call.1']
    #allocation12 [shape = 'u8[4096]{0}', space=vmem, size = 0x1000, scoped, tag = 'output window, operand 0, single buffered']
    %7 = vsyncpa [#allocation8], 0
    %8 = vsyncpa [#allocation11], 0
    %9 = vsyncpa [#allocation9], 0
    // Predicated region
    $region2: #{tpu_custom_call.1} parent=1 // pred_check
      _
    $region3: #{tpu_custom_call.1} parent=1 // pred_check_branch
      %11 = sbr.rel (0) target = $region5
    $region4: #{tpu_custom_call.1} parent=1 // pred_region
      %s12 = sadd.s32 0, 0
      %s13 = smul.u32 2, %s12
      %s15 = ssub.s32 512, 512
      %16 = vsyncadd [#allocation8], %s15
      %s17 = smul.addr %s13, 2
      %s18 = smul.addr %s17, 128
      %s19 = scalar_lea.hbm %s0, %s18
      %s20 = sshll.u32 [#allocation7], 4
      %s21 = int_to_ptr.vmem [resolvable:$true] %s20
      %26 = dma.hbm_to_vmem [thread:$0]  %s19, 512, %s21, [#allocation8], 128, 128, 8
    $region5: #{tpu_custom_call.1} parent=1 // pred_fallthru
      _
    // Predicated region
    $region6: #{tpu_custom_call.1} parent=1 // pred_check
      _
    $region7: #{tpu_custom_call.1} parent=1 // pred_check_branch
      %28 = sbr.rel (0) target = $region9
    $region8: #{tpu_custom_call.1} parent=1 // pred_region
      %s29 = sadd.s32 0, 0
      %s30 = smul.u32 2, %s29
      %s32 = ssub.s32 512, 512
      %33 = vsyncadd [#allocation11], %s32
      %s34 = smul.addr %s30, 2
      %s35 = smul.addr %s34, 128
      %s36 = scalar_lea.hbm %s1, %s35
      %s37 = sshll.u32 [#allocation10], 4
      %s38 = int_to_ptr.vmem [resolvable:$true] %s37
      %43 = dma.hbm_to_vmem [thread:$0]  %s36, 512, %s38, [#allocation11], 128, 128, 8
    $region9: #{tpu_custom_call.1} parent=1 // pred_fallthru
      _
    // Predicated region
    $region10: #{tpu_custom_call.1} parent=1 // pred_check
      _
    $region11: #{tpu_custom_call.1} parent=1 // pred_check_branch
      %45 = sbr.rel (0) target = $region13
    $region12: #{tpu_custom_call.1} parent=1 // pred_region
      %46 = dma.done [#allocation8], 512
    $region13: #{tpu_custom_call.1} parent=1 // pred_fallthru
      _
    // Predicated region
    $region14: #{tpu_custom_call.1} parent=1 // pred_check
      _
    $region15: #{tpu_custom_call.1} parent=1 // pred_check_branch
      %48 = sbr.rel (0) target = $region17
    $region16: #{tpu_custom_call.1} parent=1 // pred_region
      %49 = dma.done [#allocation11], 512
    $region17: #{tpu_custom_call.1} parent=1 // pred_fallthru
      _
    %s50 = sadd.s32 0, 0
    %s51 = smul.u32 2, %s50
    %s52 = sadd.s32 0, 0
    %s53 = smul.u32 2, %s52
    %p54 = scmp.eq.s32.totalorder 0, 0
    // Predicated region
    $region18: #{tpu_custom_call.1} parent=1 // pred_check
      %p55 = pneg %p54
    $region19: #{tpu_custom_call.1} parent=1 // pred_check_branch
      %57 = sbr.rel (%p55) target = $region21
    $region20: #{tpu_custom_call.1} parent=1 // pred_region
      %vm58 = vcmask 130048
      %59 = vst.msk [vmem:[#allocation2] sm:$0xff] %vm58, 0.0
      %60 = vst.msk [vmem:[#allocation2 + $0x8] sm:$0xff] %vm58, 0.0
      %61 = vst.msk [vmem:[#allocation3] sm:$0xff] %vm58, 0.0
      %62 = vst.msk [vmem:[#allocation3 + $0x8] sm:$0xff] %vm58, 0.0
      %63 = vst.msk [vmem:[#allocation4] sm:$0xff] %vm58, 0.0
      %64 = vst.msk [vmem:[#allocation4 + $0x8] sm:$0xff] %vm58, 0.0
      %vm65 = vcmask 121856
      %66 = vst.msk [vmem:[#allocation5] sm:$0xff] %vm65, 0.0
      %67 = vst.msk [vmem:[#allocation5 + $0x8] sm:$0xff] %vm65, 0.0
      %68 = vst.msk [vmem:[#allocation6] sm:$0xff] %vm58, 0.0
      %vm69 = vcmask 129024
      %70 = vst.msk [vmem:[#allocation6 + $0x8] sm:$0x7f] %vm69, 0.0
    $region21: #{tpu_custom_call.1} parent=1 // pred_fallthru
      _
    %v71 = vld [vmem:[#allocation7] sm:$0xff]
    %v72 = vld [vmem:[#allocation7 + $0x8] sm:$0xff]
    %v73 = vld [vmem:[#allocation7 + $0x10] sm:$0xff]
    %v74 = vld [vmem:[#allocation7 + $0x18] sm:$0xff]
    %v75 = vld [vmem:[#allocation10] sm:$0xff]
    %v76 = vld [vmem:[#allocation10 + $0x8] sm:$0xff]
    %v77 = vld [vmem:[#allocation10 + $0x10] sm:$0xff]
    %v78 = vld [vmem:[#allocation10 + $0x18] sm:$0xff]
    %v79 = vsub.f32 %v71, %v75
    %v80 = vsub.f32 %v72, %v76
    %v81 = vsub.f32 %v73, %v77
    %v82 = vsub.f32 %v74, %v78
    %v83 = vld [vmem:[#allocation2] sm:$0xff]
    %v84 = vld [vmem:[#allocation2 + $0x8] sm:$0xff]
    %v85 = vmul.f32 %v79, %v79
    %v86 = vmul.f32 %v80, %v80
    %v87 = vmul.f32 %v81, %v81
    %v88 = vmul.f32 %v82, %v82
    %vm89 = vcmask 130048
    %v90 = vsel %vm89, %v85, 0.0
    %v91 = vsel %vm89, %v87, 0.0
    %v92 = vadd.f32 %v90, %v91
    %v93 = vsel %vm89, %v86, 0.0
    %v94 = vsel %vm89, %v88, 0.0
    %v95 = vadd.f32 %v93, %v94
    %v96 = vadd.f32 %v83, %v92
    %v97 = vadd.f32 %v84, %v95
    %98 = vst.msk [vmem:[#allocation2] sm:$0xff] %vm89, %v96
    %99 = vst.msk [vmem:[#allocation2 + $0x8] sm:$0xff] %vm89, %v97
    %v100 = vadd.f32 %v71, 1e-08
    %v101 = vadd.f32 %v72, 1e-08
    %v102 = vadd.f32 %v73, 1e-08
    %v103 = vadd.f32 %v74, 1e-08
    %v104 = vadd.f32 %v75, 1e-08
    %v105 = vadd.f32 %v76, 1e-08
    %v106 = vadd.f32 %v77, 1e-08
    %v107 = vadd.f32 %v78, 1e-08
    %v108 = vrcp.pop %v104
    %v109 = vmul.f32 %v100, %v108
    %v110 = vrcp.pop %v105
    %v111 = vmul.f32 %v101, %v110
    %v112 = vrcp.pop %v106
    %v113 = vmul.f32 %v102, %v112
    %v114 = vrcp.pop %v107
    %v115 = vmul.f32 %v103, %v114
    %v116 = vlog2.pop %v109
    %v117 = vmul.f32 %v116, 0.6931472
    %v118 = vlog2.pop %v111
    %v119 = vmul.f32 %v118, 0.6931472
    %v120 = vlog2.pop %v113
    %v121 = vmul.f32 %v120, 0.6931472
    %v122 = vlog2.pop %v115
    %v123 = vmul.f32 %v122, 0.6931472
    %v124 = vld [vmem:[#allocation3] sm:$0xff]
    %v125 = vld [vmem:[#allocation3 + $0x8] sm:$0xff]
    %v126 = vsel %vm89, %v117, 0.0
    %v127 = vsel %vm89, %v121, 0.0
    %v128 = vadd.f32 %v126, %v127
    %v129 = vsel %vm89, %v119, 0.0
    %v130 = vsel %vm89, %v123, 0.0
    %v131 = vadd.f32 %v129, %v130
    %v132 = vadd.f32 %v124, %v128
    %v133 = vadd.f32 %v125, %v131
    %134 = vst.msk [vmem:[#allocation3] sm:$0xff] %vm89, %v132
    %135 = vst.msk [vmem:[#allocation3 + $0x8] sm:$0xff] %vm89, %v133
    %v136 = vld [vmem:[#allocation4] sm:$0xff]
    %v137 = vld [vmem:[#allocation4 + $0x8] sm:$0xff]
    %v138 = vmul.f32 %v117, %v117
    %v139 = vmul.f32 %v119, %v119
    %v140 = vmul.f32 %v121, %v121
    %v141 = vmul.f32 %v123, %v123
    %v142 = vsel %vm89, %v138, 0.0
    %v143 = vsel %vm89, %v140, 0.0
    %v144 = vadd.f32 %v142, %v143
    %v145 = vsel %vm89, %v139, 0.0
    %v146 = vsel %vm89, %v141, 0.0
    %v147 = vadd.f32 %v145, %v146
    %v148 = vadd.f32 %v136, %v144
    %v149 = vadd.f32 %v137, %v147
    %150 = vst.msk [vmem:[#allocation4] sm:$0xff] %vm89, %v148
    %151 = vst.msk [vmem:[#allocation4 + $0x8] sm:$0xff] %vm89, %v149
    %v152 = vld [vmem:[#allocation5] sm:$0xff]
    %v153 = vld [vmem:[#allocation5 + $0x8] sm:$0xff]
    %158 = vrot.lane.b32.xlu0 %v79, 127
    %v159 = vpop.permute.xlu0 %158
    %160 = vrot.lane.b32.xlu0 %v80, 127
    %v161 = vpop.permute.xlu0 %160
    %162 = vrot.lane.b32.xlu0 %v81, 127
    %v163 = vpop.permute.xlu0 %162
    %164 = vrot.lane.b32.xlu0 %v82, 127
    %v165 = vpop.permute.xlu0 %164
    %v170 = vsub.f32 %v79, %v159
    %v171 = vsub.f32 %v80, %v161
    %v172 = vsub.f32 %v81, %v163
    %v173 = vsub.f32 %v82, %v165
    %v174 = vand.u32 2147483647, %v170
    %v175 = vand.u32 2147483647, %v171
    %v176 = vand.u32 2147483647, %v172
    %v177 = vand.u32 2147483647, %v173
    %vm178 = vcmask 121856
    %v179 = vsel %vm178, %v174, 0.0
    %v180 = vsel %vm178, %v176, 0.0
    %v181 = vadd.f32 %v179, %v180
    %v182 = vsel %vm178, %v175, 0.0
    %v183 = vsel %vm178, %v177, 0.0
    %v184 = vadd.f32 %v182, %v183
    %v185 = vadd.f32 %v152, %v181
    %v186 = vadd.f32 %v153, %v184
    %187 = vst.msk [vmem:[#allocation5] sm:$0xff] %vm178, %v185
    %188 = vst.msk [vmem:[#allocation5 + $0x8] sm:$0xff] %vm178, %v186
    %v189 = vld [vmem:[#allocation6] sm:$0xff]
    %v190 = vld [vmem:[#allocation6 + $0x8] sm:$0x7f]
    %vm191 = vcmask 1046528
    %v192 = vrot.slane %v79, 1
    %v193 = vrot.slane %v80, 1
    %v194 = vsel %vm191, %v192, %v193
    %v195 = vrot.slane %v81, 1
    %v196 = vrot.slane %v82, 1
    %v197 = vsel %vm191, %v195, %v196
    %v202 = vsub.f32 %v79, %v194
    %v203 = vsub.f32 %v80, %v193
    %v204 = vsub.f32 %v81, %v197
    %v205 = vsub.f32 %v82, %v196
    %v206 = vand.u32 2147483647, %v202
    %v207 = vand.u32 2147483647, %v203
    %v208 = vand.u32 2147483647, %v204
    %v209 = vand.u32 2147483647, %v205
    %v210 = vsel %vm89, %v206, 0.0
    %v211 = vsel %vm89, %v208, 0.0
    %v212 = vadd.f32 %v210, %v211
    %vm213 = vcmask 129024
    %v214 = vsel %vm213, %v207, 0.0
    %v215 = vsel %vm213, %v209, 0.0
    %v216 = vadd.f32 %v214, %v215
    %v217 = vadd.f32 %v189, %v212
    %v218 = vadd.f32 %v190, %v216
    %219 = vst.msk [vmem:[#allocation6] sm:$0xff] %vm89, %v217
    %220 = vst.msk [vmem:[#allocation6 + $0x8] sm:$0x7f] %vm213, %v218
    // Predicated region
    $region22: #{tpu_custom_call.1} parent=1 // pred_check
      %p221 = pneg %p54
    $region23: #{tpu_custom_call.1} parent=1 // pred_check_branch
      %223 = sbr.rel (%p221) target = $region25
    $region24: #{tpu_custom_call.1} parent=1 // pred_region
      %v224 = vlaneseq
      %v225 = vshrl.u32 %v224, 7
      %v226 = vlaneseq
      %v227 = vand.u32 %v226, 127
      %v228 = vld [vmem:[#allocation2] sm:$0xff]
      %v229 = vld [vmem:[#allocation2 + $0x8] sm:$0xff]
      %v230 = vsel %vm89, %v228, 0.0
      %v231 = vsel %vm89, %v229, 0.0
      %v232 = vadd.f32 %v230, %v231
      %233 = vadd.xlane.f32.xlu0 %v232
      %v234 = vpop.xlane.xlu0 %233
      %v235 = vrot.slane %v234, 4
      %v236 = vadd.f32 %v234, %v235
      %v237 = vrot.slane %v236, 2
      %v238 = vadd.f32 %v236, %v237
      %v239 = vrot.slane %v238, 1
      %v240 = vadd.f32 %v238, %v239
      %s241 = vtos %v240
      %vm242 = vcmp.eq.s32.totalorder %v225, 0
      %vm243 = vcmp.eq.s32.totalorder %v227, 0
      %vm244 = vmand %vm242, %vm243
      %v245 = vstv %s241
      %v246 = vsel %vm244, %v245, 0.0
      %v247 = vld [vmem:[#allocation3] sm:$0xff]
      %v248 = vld [vmem:[#allocation3 + $0x8] sm:$0xff]
      %v249 = vsel %vm89, %v247, 0.0
      %v250 = vsel %vm89, %v248, 0.0
      %v251 = vadd.f32 %v249, %v250
      %252 = vadd.xlane.f32.xlu0 %v251
      %v253 = vpop.xlane.xlu0 %252
      %v254 = vrot.slane %v253, 4
      %v255 = vadd.f32 %v253, %v254
      %v256 = vrot.slane %v255, 2
      %v257 = vadd.f32 %v255, %v256
      %v258 = vrot.slane %v257, 1
      %v259 = vadd.f32 %v257, %v258
      %s260 = vtos %v259
      %vm261 = vcmp.eq.s32.totalorder %v227, 1
      %vm262 = vmand %vm242, %vm261
      %v263 = vstv %s260
      %v264 = vsel %vm262, %v263, %v246
      %v265 = vld [vmem:[#allocation4] sm:$0xff]
      %v266 = vld [vmem:[#allocation4 + $0x8] sm:$0xff]
      %v267 = vsel %vm89, %v265, 0.0
      %v268 = vsel %vm89, %v266, 0.0
      %v269 = vadd.f32 %v267, %v268
      %270 = vadd.xlane.f32.xlu0 %v269
      %v271 = vpop.xlane.xlu0 %270
      %v272 = vrot.slane %v271, 4
      %v273 = vadd.f32 %v271, %v272
      %v274 = vrot.slane %v273, 2
      %v275 = vadd.f32 %v273, %v274
      %v276 = vrot.slane %v275, 1
      %v277 = vadd.f32 %v275, %v276
      %s278 = vtos %v277
      %vm279 = vcmp.eq.s32.totalorder %v227, 2
      %vm280 = vmand %vm242, %vm279
      %v281 = vstv %s278
      %v282 = vsel %vm280, %v281, %v264
      %v283 = vld [vmem:[#allocation5] sm:$0xff]
      %v284 = vld [vmem:[#allocation5 + $0x8] sm:$0xff]
      %v285 = vsel %vm178, %v283, 0.0
      %v286 = vsel %vm178, %v284, 0.0
      %v287 = vadd.f32 %v285, %v286
      %288 = vadd.xlane.f32.xlu0 %v287
      %v289 = vpop.xlane.xlu0 %288
      %v290 = vrot.slane %v289, 4
      %v291 = vadd.f32 %v289, %v290
      %v292 = vrot.slane %v291, 2
      %v293 = vadd.f32 %v291, %v292
      %v294 = vrot.slane %v293, 1
      %v295 = vadd.f32 %v293, %v294
      %s296 = vtos %v295
      %vm297 = vcmp.eq.s32.totalorder %v227, 3
      %vm298 = vmand %vm242, %vm297
      %v299 = vstv %s296
      %v300 = vsel %vm298, %v299, %v282
      %v301 = vld [vmem:[#allocation6] sm:$0xff]
      %v302 = vld [vmem:[#allocation6 + $0x8] sm:$0x7f]
      %v303 = vsel %vm89, %v301, 0.0
      %v304 = vsel %vm213, %v302, 0.0
      %v305 = vadd.f32 %v303, %v304
      %306 = vadd.xlane.f32.xlu0 %v305
      %v307 = vpop.xlane.xlu0 %306
      %v308 = vrot.slane %v307, 4
      %v309 = vadd.f32 %v307, %v308
      %v310 = vrot.slane %v309, 2
      %v311 = vadd.f32 %v309, %v310
      %v312 = vrot.slane %v311, 1
      %v313 = vadd.f32 %v311, %v312
      %s314 = vtos %v313
      %vm315 = vcmp.eq.s32.totalorder %v227, 4
      %vm316 = vmand %vm242, %vm315
      %v317 = vstv %s314
      %v318 = vsel %vm316, %v317, %v300
      %319 = vst [vmem:[#allocation12] sm:$0xff] %v318
    $region25: #{tpu_custom_call.1} parent=1 // pred_fallthru
      _
    // Predicated region
    $region26: #{tpu_custom_call.1} parent=1 // pred_check
      _
    $region27: #{tpu_custom_call.1} parent=1 // pred_check_branch
      %321 = sbr.rel (0) target = $region29
    $region28: #{tpu_custom_call.1} parent=1 // pred_region
      %s323 = ssub.s32 128, 128
      %324 = vsyncadd [#allocation9], %s323
      %s326 = sshll.u32 [#allocation12], 4
      %s327 = int_to_ptr.vmem [resolvable:$true] %s326
      %329 = dma.vmem_to_hbm [thread:$0]  %s327, 128, %s2, [#allocation9]
    $region29: #{tpu_custom_call.1} parent=1 // pred_fallthru
      _
    // Predicated region
    $region30: #{tpu_custom_call.1} parent=1 // pred_check
      _
    $region31: #{tpu_custom_call.1} parent=1 // pred_check_branch
      %331 = sbr.rel (0) target = $region33
    $region32: #{tpu_custom_call.1} parent=1 // pred_region
      %332 = dma.done [#allocation9], 128
    $region33: #{tpu_custom_call.1} parent=1 // pred_fallthru
      _
    %333 = vsyncpa [#allocation8], 1
    %334 = vsyncpa [#allocation11], 1
    %335 = vsyncpa [#allocation9], 1

</llo_original>
